<compile_context>
chip_gen: v5e
topology: v5e:2x2
jax: 0.10.0
libtpu: 0.0.40
codegen_flags: <defaults>
</compile_context>

<pallas_src>
import functools
import math

import jax
import jax.numpy as jnp
from jax.experimental import pallas as pl
from jax.experimental.pallas import tpu as pltpu

NUM_LAYERS = 6
HIDDEN_DIM = 30
IN_DIM = 2
OUT_DIM = 1

MAX_TILE = 8192     # cap on the batch (lane) tile
TILE_ALIGN = 256    # tiles are multiples of 256 so each lane-half is 128-aligned


def mlp_kernel(xt_ref, w_in_ref, b_in_ref, w_h_ref, b_h_ref, w_out_ref, b_out_ref,
               o_ref, *, half):
    # xt_ref:   (IN_DIM, tile)       transposed input tile
    # w_in_ref: (HIDDEN, IN_DIM)     PyTorch-native (out, in)
    # b_in_ref: (HIDDEN, 1)
    # w_h_ref:  (HIDDEN, HIDDEN)     PyTorch-native (out, in)
    # b_h_ref:  (HIDDEN, 1)
    # w_out_ref:(HIDDEN, 1)          output weight as a column
    # b_out_ref:(1, 1)
    # o_ref:    (1, tile)            lane-dense output tile
    w_in0 = w_in_ref[:, 0:1]                    # (30, 1)
    w_in1 = w_in_ref[:, 1:2]                    # (30, 1)
    b_in = b_in_ref[...]                        # (30, 1)
    w_h = w_h_ref[...]                          # (30, 30)
    w_out = w_out_ref[...]                      # (30, 1)
    b_out = b_out_ref[...]                      # (1, 1)

    # Hoisted broadcasts (JAX does not CSE broadcast_in_dim inside the loop).
    b_h_b = jnp.broadcast_to(b_h_ref[...], (HIDDEN_DIM, half))   # (30, half)

    # Two independent lane-half chains -> ILP between EUP (tanh) and MXU (dot).
    xt0 = xt_ref[:, :half]                      # (2, half)
    xt1 = xt_ref[:, half:]                      # (2, half)

    # Input layer: K=2 matmul done as two VPU FMAs (broadcast weight columns).
    h0 = w_in0 * xt0[0:1, :] + w_in1 * xt0[1:2, :] + b_in        # (30, half)
    h1 = w_in0 * xt1[0:1, :] + w_in1 * xt1[1:2, :] + b_in        # (30, half)

    # 6 applications of the SAME shared hidden layer (tanh -> linear),
    # statically unrolled and interleaved across the two halves.
    for _ in range(NUM_LAYERS):
        h0 = jnp.dot(w_h, jnp.tanh(h0), preferred_element_type=jnp.float32) + b_h_b
        h1 = jnp.dot(w_h, jnp.tanh(h1), preferred_element_type=jnp.float32) + b_h_b

    # Output layer (30 -> 1): VPU multiply + XLU sublane reduce (no 1-wide MXU matmul).
    t0 = jnp.tanh(h0)                                            # (30, half)
    t1 = jnp.tanh(h1)
    o_ref[:, :half] = jnp.sum(w_out * t0, axis=0, keepdims=True) + b_out   # (1, half)
    o_ref[:, half:] = jnp.sum(w_out * t1, axis=0, keepdims=True) + b_out


def _round_up(n, m):
    return pl.cdiv(n, m) * m


@jax.jit
def nn_v_forward(x, w_in, b_in, w_h, b_h, w_out, b_out):
    n = x.shape[0]

    # Aim for >= 2 balanced tiles (so v7x's two TensorCores both get work),
    # capped at MAX_TILE; tile is a multiple of 256 so each lane-half is
    # 128-aligned inside the kernel.
    tile = min(MAX_TILE, _round_up(pl.cdiv(n, 2), TILE_ALIGN))
    n_pad = _round_up(n, tile)
    num_tiles = n_pad // tile

    # Transpose once in the wrapper and pad the (lane) batch axis.
    # TODO(synk): could drop this extra XLA pass by accepting x in (2, N)
    # layout upstream or masking a ragged last tile in-kernel.
    x_t = jnp.pad(x.T.astype(jnp.float32), ((0, 0), (0, n_pad - n)))   # (2, n_pad)

    out = pl.pallas_call(
        functools.partial(mlp_kernel, half=tile // 2),
        out_shape=jax.ShapeDtypeStruct((1, n_pad), jnp.float32),
        grid=(num_tiles,),
        in_specs=[
            pl.BlockSpec((IN_DIM, tile), lambda i: (0, i)),            # x^T tile
            pl.BlockSpec((HIDDEN_DIM, IN_DIM), lambda i: (0, 0)),      # resident weights
            pl.BlockSpec((HIDDEN_DIM, 1), lambda i: (0, 0)),
            pl.BlockSpec((HIDDEN_DIM, HIDDEN_DIM), lambda i: (0, 0)),
            pl.BlockSpec((HIDDEN_DIM, 1), lambda i: (0, 0)),
            pl.BlockSpec((HIDDEN_DIM, 1), lambda i: (0, 0)),
            pl.BlockSpec((1, 1), lambda i: (0, 0)),
        ],
        out_specs=pl.BlockSpec((1, tile), lambda i: (0, i)),           # lane-dense output
        compiler_params=pltpu.CompilerParams(
            dimension_semantics=("parallel",),                          # megacore on v7x
        ),
    )(x_t, w_in, b_in, w_h, b_h, w_out, b_out)

    return out[0, :n].reshape(n, OUT_DIM)


def init_params(key):
    """Deterministic init mimicking torch.nn.Linear default (uniform +-1/sqrt(fan_in)).

    Layouts match what the kernel expects:
      w_in (30, 2), b_in (30, 1), w_h (30, 30), b_h (30, 1), w_out (30, 1), b_out (1, 1)
    """

    def linear_init(k, fan_in, fan_out):
        kw, kb = jax.random.split(k)
        bound = 1.0 / math.sqrt(fan_in)
        w = jax.random.uniform(kw, (fan_out, fan_in), jnp.float32, -bound, bound)
        b = jax.random.uniform(kb, (fan_out, 1), jnp.float32, -bound, bound)
        return w, b

    k_in, k_h, k_out = jax.random.split(key, 3)
    w_in, b_in = linear_init(k_in, IN_DIM, HIDDEN_DIM)          # (30,2), (30,1)
    w_h, b_h = linear_init(k_h, HIDDEN_DIM, HIDDEN_DIM)         # (30,30), (30,1)
    w_out_row, b_out = linear_init(k_out, HIDDEN_DIM, OUT_DIM)  # (1,30), (1,1)
    w_out = w_out_row.T                                         # (30,1) column for kernel
    return w_in, b_in, w_h, b_h, w_out, b_out


def nn_v_reference(x, w_in, b_in, w_h, b_h, w_out, b_out):
    """Pure-JAX reference in standard (batch, feature) layout."""
    h = x @ w_in.T + b_in.T
    for _ in range(NUM_LAYERS):
        h = jnp.tanh(h) @ w_h.T + b_h.T
    return jnp.tanh(h) @ w_out + b_out.T


if __name__ == "__main__":
    key = jax.random.PRNGKey(0)
    k_params, k_x1, k_x2 = jax.random.split(key, 3)
    params = init_params(k_params)

    # Small batch consistent with the module (features = 2): single-tile path.
    x_small = jax.random.normal(k_x1, (8, IN_DIM), jnp.float32)
    out_small = jax.block_until_ready(nn_v_forward(x_small, *params))
    ref_small = nn_v_reference(x_small, *params)
    assert out_small.shape == (8, OUT_DIM), out_small.shape
    assert jnp.allclose(out_small, ref_small, atol=1e-5, rtol=1e-5)

    # Larger batch to exercise the multi-tile (>=2 tiles) grid + padding path.
    x_big = jax.random.normal(k_x2, (1000, IN_DIM), jnp.float32)
    out_big = jax.block_until_ready(nn_v_forward(x_big, *params))
    ref_big = nn_v_reference(x_big, *params)
    assert out_big.shape == (1000, OUT_DIM), out_big.shape
    assert jnp.allclose(out_big, ref_big, atol=1e-5, rtol=1e-5)

    print("KERNEL_OK")
</pallas_src>

<mosaic_0001>
module attributes {stable_mosaic.version = 11 : i64} {
  func.func @mlp_kernel(%arg0: i32, %arg1: memref<2x256xf32, #tpu.memory_space<vmem>>, %arg2: memref<30x2xf32, #tpu.memory_space<vmem>>, %arg3: memref<30x1xf32, #tpu.memory_space<vmem>>, %arg4: memref<30x30xf32, #tpu.memory_space<vmem>>, %arg5: memref<30x1xf32, #tpu.memory_space<vmem>>, %arg6: memref<30x1xf32, #tpu.memory_space<vmem>>, %arg7: memref<1x1xf32, #tpu.memory_space<vmem>>, %arg8: memref<1x256xf32, #tpu.memory_space<vmem>>) attributes {dimension_semantics = [#tpu.dimension_semantics<parallel>], iteration_bounds = array<i64: 1>, scalar_prefetch = 0 : i64, scratch_operands = 0 : i64, tpu.core_type = #tpu.core_type<tc>, window_params = [{transform_indices = @transform_0, window_bounds = array<i64: 2, 256>}, {pipeline_mode = #tpu.pipeline_mode<synchronous>, transform_indices = @transform_1, window_bounds = array<i64: 30, 2>}, {pipeline_mode = #tpu.pipeline_mode<synchronous>, transform_indices = @transform_2, window_bounds = array<i64: 30, 1>}, {pipeline_mode = #tpu.pipeline_mode<synchronous>, transform_indices = @transform_3, window_bounds = array<i64: 30, 30>}, {pipeline_mode = #tpu.pipeline_mode<synchronous>, transform_indices = @transform_4, window_bounds = array<i64: 30, 1>}, {pipeline_mode = #tpu.pipeline_mode<synchronous>, transform_indices = @transform_5, window_bounds = array<i64: 30, 1>}, {pipeline_mode = #tpu.pipeline_mode<synchronous>, transform_indices = @transform_6, window_bounds = array<i64: 1, 1>}, {transform_indices = @transform_7, window_bounds = array<i64: 1, 256>}]} {
    %c0 = arith.constant 0 : index
    %c0_0 = arith.constant 0 : index
    %0 = vector.load %arg2[%c0, %c0_0] : memref<30x2xf32, #tpu.memory_space<vmem>>, vector<30x1xf32>
    %c0_1 = arith.constant 0 : index
    %c1 = arith.constant 1 : index
    %1 = vector.load %arg2[%c0_1, %c1] : memref<30x2xf32, #tpu.memory_space<vmem>>, vector<30x1xf32>
    %c0_2 = arith.constant 0 : index
    %c0_3 = arith.constant 0 : index
    %2 = vector.load %arg3[%c0_2, %c0_3] : memref<30x1xf32, #tpu.memory_space<vmem>>, vector<30x1xf32>
    %c0_4 = arith.constant 0 : index
    %c0_5 = arith.constant 0 : index
    %3 = vector.load %arg4[%c0_4, %c0_5] : memref<30x30xf32, #tpu.memory_space<vmem>>, vector<30x30xf32>
    %c0_6 = arith.constant 0 : index
    %c0_7 = arith.constant 0 : index
    %4 = vector.load %arg6[%c0_6, %c0_7] : memref<30x1xf32, #tpu.memory_space<vmem>>, vector<30x1xf32>
    %c0_8 = arith.constant 0 : index
    %c0_9 = arith.constant 0 : index
    %5 = vector.load %arg7[%c0_8, %c0_9] : memref<1x1xf32, #tpu.memory_space<vmem>>, vector<1x1xf32>
    %c0_10 = arith.constant 0 : index
    %c0_11 = arith.constant 0 : index
    %6 = vector.load %arg5[%c0_10, %c0_11] : memref<30x1xf32, #tpu.memory_space<vmem>>, vector<30x1xf32>
    %7 = vector.shape_cast %6 : vector<30x1xf32> to vector<30x1xf32>
    %8 = vector.broadcast %7 : vector<30x1xf32> to vector<30x128xf32>
    %c0_12 = arith.constant 0 : index
    %c0_13 = arith.constant 0 : index
    %9 = vector.load %arg1[%c0_12, %c0_13] : memref<2x256xf32, #tpu.memory_space<vmem>>, vector<2x128xf32>
    %c0_14 = arith.constant 0 : index
    %c128 = arith.constant 128 : index
    %10 = vector.load %arg1[%c0_14, %c128] : memref<2x256xf32, #tpu.memory_space<vmem>>, vector<2x128xf32>
    %11 = vector.extract_strided_slice %9 {offsets = [0, 0], sizes = [1, 128], strides = [1, 1]} : vector<2x128xf32> to vector<1x128xf32>
    %12 = vector.broadcast %0 : vector<30x1xf32> to vector<30x128xf32>
    %13 = vector.broadcast %11 : vector<1x128xf32> to vector<30x128xf32>
    %14 = arith.mulf %12, %13 : vector<30x128xf32>
    %15 = vector.extract_strided_slice %9 {offsets = [1, 0], sizes = [1, 128], strides = [1, 1]} : vector<2x128xf32> to vector<1x128xf32>
    %16 = vector.broadcast %1 : vector<30x1xf32> to vector<30x128xf32>
    %17 = vector.broadcast %15 : vector<1x128xf32> to vector<30x128xf32>
    %18 = arith.mulf %16, %17 : vector<30x128xf32>
    %19 = arith.addf %14, %18 : vector<30x128xf32>
    %20 = vector.broadcast %2 : vector<30x1xf32> to vector<30x128xf32>
    %21 = arith.addf %19, %20 : vector<30x128xf32>
    %22 = vector.extract_strided_slice %10 {offsets = [0, 0], sizes = [1, 128], strides = [1, 1]} : vector<2x128xf32> to vector<1x128xf32>
    %23 = vector.broadcast %0 : vector<30x1xf32> to vector<30x128xf32>
    %24 = vector.broadcast %22 : vector<1x128xf32> to vector<30x128xf32>
    %25 = arith.mulf %23, %24 : vector<30x128xf32>
    %26 = vector.extract_strided_slice %10 {offsets = [1, 0], sizes = [1, 128], strides = [1, 1]} : vector<2x128xf32> to vector<1x128xf32>
    %27 = vector.broadcast %1 : vector<30x1xf32> to vector<30x128xf32>
    %28 = vector.broadcast %26 : vector<1x128xf32> to vector<30x128xf32>
    %29 = arith.mulf %27, %28 : vector<30x128xf32>
    %30 = arith.addf %25, %29 : vector<30x128xf32>
    %31 = vector.broadcast %2 : vector<30x1xf32> to vector<30x128xf32>
    %32 = arith.addf %30, %31 : vector<30x128xf32>
    %33 = math.tanh %21 : vector<30x128xf32>
    %cst = arith.constant dense<0.000000e+00> : vector<30x128xf32>
    %34 = tpu.matmul %3, %33, %cst {dimension_numbers = #tpu.dot_dimension_numbers<[1], [0], [0], [1], [0, 0, 1, 1], [], []>} : vector<30x30xf32>, vector<30x128xf32>, vector<30x128xf32> -> vector<30x128xf32>
    %35 = arith.addf %34, %8 : vector<30x128xf32>
    %36 = math.tanh %32 : vector<30x128xf32>
    %cst_15 = arith.constant dense<0.000000e+00> : vector<30x128xf32>
    %37 = tpu.matmul %3, %36, %cst_15 {dimension_numbers = #tpu.dot_dimension_numbers<[1], [0], [0], [1], [0, 0, 1, 1], [], []>} : vector<30x30xf32>, vector<30x128xf32>, vector<30x128xf32> -> vector<30x128xf32>
    %38 = arith.addf %37, %8 : vector<30x128xf32>
    %39 = math.tanh %35 : vector<30x128xf32>
    %cst_16 = arith.constant dense<0.000000e+00> : vector<30x128xf32>
    %40 = tpu.matmul %3, %39, %cst_16 {dimension_numbers = #tpu.dot_dimension_numbers<[1], [0], [0], [1], [0, 0, 1, 1], [], []>} : vector<30x30xf32>, vector<30x128xf32>, vector<30x128xf32> -> vector<30x128xf32>
    %41 = arith.addf %40, %8 : vector<30x128xf32>
    %42 = math.tanh %38 : vector<30x128xf32>
    %cst_17 = arith.constant dense<0.000000e+00> : vector<30x128xf32>
    %43 = tpu.matmul %3, %42, %cst_17 {dimension_numbers = #tpu.dot_dimension_numbers<[1], [0], [0], [1], [0, 0, 1, 1], [], []>} : vector<30x30xf32>, vector<30x128xf32>, vector<30x128xf32> -> vector<30x128xf32>
    %44 = arith.addf %43, %8 : vector<30x128xf32>
    %45 = math.tanh %41 : vector<30x128xf32>
    %cst_18 = arith.constant dense<0.000000e+00> : vector<30x128xf32>
    %46 = tpu.matmul %3, %45, %cst_18 {dimension_numbers = #tpu.dot_dimension_numbers<[1], [0], [0], [1], [0, 0, 1, 1], [], []>} : vector<30x30xf32>, vector<30x128xf32>, vector<30x128xf32> -> vector<30x128xf32>
    %47 = arith.addf %46, %8 : vector<30x128xf32>
    %48 = math.tanh %44 : vector<30x128xf32>
    %cst_19 = arith.constant dense<0.000000e+00> : vector<30x128xf32>
    %49 = tpu.matmul %3, %48, %cst_19 {dimension_numbers = #tpu.dot_dimension_numbers<[1], [0], [0], [1], [0, 0, 1, 1], [], []>} : vector<30x30xf32>, vector<30x128xf32>, vector<30x128xf32> -> vector<30x128xf32>
    %50 = arith.addf %49, %8 : vector<30x128xf32>
    %51 = math.tanh %47 : vector<30x128xf32>
    %cst_20 = arith.constant dense<0.000000e+00> : vector<30x128xf32>
    %52 = tpu.matmul %3, %51, %cst_20 {dimension_numbers = #tpu.dot_dimension_numbers<[1], [0], [0], [1], [0, 0, 1, 1], [], []>} : vector<30x30xf32>, vector<30x128xf32>, vector<30x128xf32> -> vector<30x128xf32>
    %53 = arith.addf %52, %8 : vector<30x128xf32>
    %54 = math.tanh %50 : vector<30x128xf32>
    %cst_21 = arith.constant dense<0.000000e+00> : vector<30x128xf32>
    %55 = tpu.matmul %3, %54, %cst_21 {dimension_numbers = #tpu.dot_dimension_numbers<[1], [0], [0], [1], [0, 0, 1, 1], [], []>} : vector<30x30xf32>, vector<30x128xf32>, vector<30x128xf32> -> vector<30x128xf32>
    %56 = arith.addf %55, %8 : vector<30x128xf32>
    %57 = math.tanh %53 : vector<30x128xf32>
    %cst_22 = arith.constant dense<0.000000e+00> : vector<30x128xf32>
    %58 = tpu.matmul %3, %57, %cst_22 {dimension_numbers = #tpu.dot_dimension_numbers<[1], [0], [0], [1], [0, 0, 1, 1], [], []>} : vector<30x30xf32>, vector<30x128xf32>, vector<30x128xf32> -> vector<30x128xf32>
    %59 = arith.addf %58, %8 : vector<30x128xf32>
    %60 = math.tanh %56 : vector<30x128xf32>
    %cst_23 = arith.constant dense<0.000000e+00> : vector<30x128xf32>
    %61 = tpu.matmul %3, %60, %cst_23 {dimension_numbers = #tpu.dot_dimension_numbers<[1], [0], [0], [1], [0, 0, 1, 1], [], []>} : vector<30x30xf32>, vector<30x128xf32>, vector<30x128xf32> -> vector<30x128xf32>
    %62 = arith.addf %61, %8 : vector<30x128xf32>
    %63 = math.tanh %59 : vector<30x128xf32>
    %cst_24 = arith.constant dense<0.000000e+00> : vector<30x128xf32>
    %64 = tpu.matmul %3, %63, %cst_24 {dimension_numbers = #tpu.dot_dimension_numbers<[1], [0], [0], [1], [0, 0, 1, 1], [], []>} : vector<30x30xf32>, vector<30x128xf32>, vector<30x128xf32> -> vector<30x128xf32>
    %65 = arith.addf %64, %8 : vector<30x128xf32>
    %66 = math.tanh %62 : vector<30x128xf32>
    %cst_25 = arith.constant dense<0.000000e+00> : vector<30x128xf32>
    %67 = tpu.matmul %3, %66, %cst_25 {dimension_numbers = #tpu.dot_dimension_numbers<[1], [0], [0], [1], [0, 0, 1, 1], [], []>} : vector<30x30xf32>, vector<30x128xf32>, vector<30x128xf32> -> vector<30x128xf32>
    %68 = arith.addf %67, %8 : vector<30x128xf32>
    %69 = math.tanh %65 : vector<30x128xf32>
    %70 = math.tanh %68 : vector<30x128xf32>
    %71 = vector.broadcast %4 : vector<30x1xf32> to vector<30x128xf32>
    %72 = arith.mulf %71, %69 : vector<30x128xf32>
    %cst_26 = arith.constant dense<0.000000e+00> : vector<128xf32>
    %73 = vector.multi_reduction <add>, %72, %cst_26 [0] : vector<30x128xf32> to vector<128xf32>
    %74 = vector.shape_cast %73 : vector<128xf32> to vector<1x128xf32>
    %75 = vector.broadcast %5 : vector<1x1xf32> to vector<1x128xf32>
    %76 = arith.addf %74, %75 : vector<1x128xf32>
    %c0_27 = arith.constant 0 : index
    %c0_28 = arith.constant 0 : index
    %77 = vector.load %arg8[%c0_27, %c0_28] : memref<1x256xf32, #tpu.memory_space<vmem>>, vector<1x128xf32>
    tpu.vector_store %arg8[%c0_27, %c0_28], %76 {strides = array<i32>} : memref<1x256xf32, #tpu.memory_space<vmem>>, vector<1x128xf32>,
    %78 = vector.broadcast %4 : vector<30x1xf32> to vector<30x128xf32>
    %79 = arith.mulf %78, %70 : vector<30x128xf32>
    %cst_29 = arith.constant dense<0.000000e+00> : vector<128xf32>
    %80 = vector.multi_reduction <add>, %79, %cst_29 [0] : vector<30x128xf32> to vector<128xf32>
    %81 = vector.shape_cast %80 : vector<128xf32> to vector<1x128xf32>
    %82 = vector.broadcast %5 : vector<1x1xf32> to vector<1x128xf32>
    %83 = arith.addf %81, %82 : vector<1x128xf32>
    %c0_30 = arith.constant 0 : index
    %c128_31 = arith.constant 128 : index
    %84 = vector.load %arg8[%c0_30, %c128_31] : memref<1x256xf32, #tpu.memory_space<vmem>>, vector<1x128xf32>
    tpu.vector_store %arg8[%c0_30, %c128_31], %83 {strides = array<i32>} : memref<1x256xf32, #tpu.memory_space<vmem>>, vector<1x128xf32>,
    return
  }
  func.func @transform_0(%arg0: i32) -> (i32, i32) {
    %c0_i32 = arith.constant 0 : i32
    %c0_i32_0 = arith.constant 0 : i32
    return %c0_i32, %arg0 : i32, i32
  }
  func.func @transform_1(%arg0: i32) -> (i32, i32) {
    %c0_i32 = arith.constant 0 : i32
    %c0_i32_0 = arith.constant 0 : i32
    %c0_i32_1 = arith.constant 0 : i32
    return %c0_i32, %c0_i32_0 : i32, i32
  }
  func.func @transform_2(%arg0: i32) -> (i32, i32) {
    %c0_i32 = arith.constant 0 : i32
    %c0_i32_0 = arith.constant 0 : i32
    %c0_i32_1 = arith.constant 0 : i32
    return %c0_i32, %c0_i32_0 : i32, i32
  }
  func.func @transform_3(%arg0: i32) -> (i32, i32) {
    %c0_i32 = arith.constant 0 : i32
    %c0_i32_0 = arith.constant 0 : i32
    %c0_i32_1 = arith.constant 0 : i32
    return %c0_i32, %c0_i32_0 : i32, i32
  }
  func.func @transform_4(%arg0: i32) -> (i32, i32) {
    %c0_i32 = arith.constant 0 : i32
    %c0_i32_0 = arith.constant 0 : i32
    %c0_i32_1 = arith.constant 0 : i32
    return %c0_i32, %c0_i32_0 : i32, i32
  }
  func.func @transform_5(%arg0: i32) -> (i32, i32) {
    %c0_i32 = arith.constant 0 : i32
    %c0_i32_0 = arith.constant 0 : i32
    %c0_i32_1 = arith.constant 0 : i32
    return %c0_i32, %c0_i32_0 : i32, i32
  }
  func.func @transform_6(%arg0: i32) -> (i32, i32) {
    %c0_i32 = arith.constant 0 : i32
    %c0_i32_0 = arith.constant 0 : i32
    %c0_i32_1 = arith.constant 0 : i32
    return %c0_i32, %c0_i32_0 : i32, i32
  }
  func.func @transform_7(%arg0: i32) -> (i32, i32) {
    %c0_i32 = arith.constant 0 : i32
    %c0_i32_0 = arith.constant 0 : i32
    return %c0_i32, %arg0 : i32, i32
  }
}

</mosaic_0001>

<llo_original>
// kernel: nn_v_forward.1
$region0: #{nn_v_forward.1}
  #allocation0 [shape = 'u32[]', space=smem, size = 0x4, offset = 0x4, fixed_abs, tag = 'smem constant byte address 0x4 - core index']
  #allocation1 [shape = 'u32[72,128]{1,0:T(1,128)}', space=vmem, size = 0x9000, scoped, tag = 'internal scratch']
  #allocation2 [shape = 'f32[1,1]{1,0:T(1,128)S(1)}', space=vmem, size = 0x200, scoped, tag = 'scoped memory for nn_v_forward.1']
  %s0 = inlined_call_operand.vmem [shape: f32[2,256], index: 0, kind: input, shape index: {}]
  %s1 = inlined_call_operand.vmem [shape: f32[30,2], index: 1, kind: input, shape index: {}]
  %s2 = inlined_call_operand.vmem [shape: f32[30,1], index: 2, kind: input, shape index: {}]
  %s3 = inlined_call_operand.vmem [shape: f32[30,30], index: 3, kind: input, shape index: {}]
  %s4 = inlined_call_operand.vmem [shape: f32[30,1], index: 4, kind: input, shape index: {}]
  %s5 = inlined_call_operand.vmem [shape: f32[30,1], index: 5, kind: input, shape index: {}]
  %s6 = inlined_call_operand.<no memory space> [shape: f32[1,1], index: 6, kind: input, shape index: {}]
  %s7 = inlined_call_operand.vmem [shape: f32[1,256], index: 7, kind: output, shape index: {}]
  %s8 = sld [smem:[#allocation0]]
  $region38: #{nn_v_forward.1} parent=0
    _
  %s10 = ssub.s32 1, %s8
  %s11 = scalar_select 0, %s10, %s8
  %v12 = vstv %s6
  %13 = vst [vmem:[#allocation2] sm:$0x1] %v12
  // Predicated region
  $region2: #{nn_v_forward.1} parent=0 // pred_check
    _
  $region3: #{nn_v_forward.1} parent=0 // pred_check_branch
    %15 = sbr.rel (0) target = $region5
  $region4: #{nn_v_forward.1} parent=0 // pred_region
    _
  $region5: #{nn_v_forward.1} parent=0 // pred_fallthru
    _
  // Predicated region
  $region6: #{nn_v_forward.1} parent=0 // pred_check
    _
  $region7: #{nn_v_forward.1} parent=0 // pred_check_branch
    %17 = sbr.rel (0) target = $region9
  $region8: #{nn_v_forward.1} parent=0 // pred_region
    _
  $region9: #{nn_v_forward.1} parent=0 // pred_fallthru
    _
  // Predicated region
  $region10: #{nn_v_forward.1} parent=0 // pred_check
    _
  $region11: #{nn_v_forward.1} parent=0 // pred_check_branch
    %19 = sbr.rel (0) target = $region13
  $region12: #{nn_v_forward.1} parent=0 // pred_region
    _
  $region13: #{nn_v_forward.1} parent=0 // pred_fallthru
    _
  // Predicated region
  $region14: #{nn_v_forward.1} parent=0 // pred_check
    _
  $region15: #{nn_v_forward.1} parent=0 // pred_check_branch
    %21 = sbr.rel (0) target = $region17
  $region16: #{nn_v_forward.1} parent=0 // pred_region
    _
  $region17: #{nn_v_forward.1} parent=0 // pred_fallthru
    _
  // Predicated region
  $region18: #{nn_v_forward.1} parent=0 // pred_check
    _
  $region19: #{nn_v_forward.1} parent=0 // pred_check_branch
    %23 = sbr.rel (0) target = $region21
  $region20: #{nn_v_forward.1} parent=0 // pred_region
    _
  $region21: #{nn_v_forward.1} parent=0 // pred_fallthru
    _
  // Predicated region
  $region22: #{nn_v_forward.1} parent=0 // pred_check
    _
  $region23: #{nn_v_forward.1} parent=0 // pred_check_branch
    %25 = sbr.rel (0) target = $region25
  $region24: #{nn_v_forward.1} parent=0 // pred_region
    _
  $region25: #{nn_v_forward.1} parent=0 // pred_fallthru
    _
  // Predicated region
  $region26: #{nn_v_forward.1} parent=0 // pred_check
    _
  $region27: #{nn_v_forward.1} parent=0 // pred_check_branch
    %27 = sbr.rel (0) target = $region29
  $region28: #{nn_v_forward.1} parent=0 // pred_region
    _
  $region29: #{nn_v_forward.1} parent=0 // pred_fallthru
    _
  %v28 = vld [vmem:[%s1] sm:$0xff]
  %v29 = vld [vmem:[%s1 + $0x8] sm:$0xff]
  %v30 = vld [vmem:[%s1 + $0x10] sm:$0xff]
  %v31 = vld [vmem:[%s1 + $0x18] sm:$0x3f]
  %v32 = vld [vmem:[%s2] sm:$0xff]
  %v33 = vld [vmem:[%s2 + $0x8] sm:$0xff]
  %v34 = vld [vmem:[%s2 + $0x10] sm:$0xff]
  %v35 = vld [vmem:[%s2 + $0x18] sm:$0x3f]
  %v36 = vld [vmem:[%s3] sm:$0xff]
  %v37 = vld [vmem:[%s3 + $0x8] sm:$0xff]
  %v38 = vld [vmem:[%s3 + $0x10] sm:$0xff]
  %v39 = vld [vmem:[%s3 + $0x18] sm:$0x3f]
  %v40 = vld [vmem:[%s5] sm:$0xff]
  %v41 = vld [vmem:[%s5 + $0x8] sm:$0xff]
  %v42 = vld [vmem:[%s5 + $0x10] sm:$0xff]
  %v43 = vld [vmem:[%s5 + $0x18] sm:$0x3f]
  %v44 = vld [vmem:[#allocation2] sm:$0x1]
  %v45 = vld [vmem:[%s4] sm:$0xff]
  %v46 = vld [vmem:[%s4 + $0x8] sm:$0xff]
  %v47 = vld [vmem:[%s4 + $0x10] sm:$0xff]
  %v48 = vld [vmem:[%s4 + $0x18] sm:$0x3f]
  %50 = vset.pattern.permute.xlu0 0
  %51 = vperm.xlu0 %50, %v45
  %v52 = vpop.permute.xlu0 %51
  %55 = vset.pattern.permute.xlu0 0
  %56 = vperm.xlu0 %55, %v46
  %v57 = vpop.permute.xlu0 %56
  %60 = vset.pattern.permute.xlu0 0
  %61 = vperm.xlu0 %60, %v47
  %v62 = vpop.permute.xlu0 %61
  %65 = vset.pattern.permute.xlu0 0
  %66 = vperm.xlu0 %65, %v48
  %v67 = vpop.permute.xlu0 %66
  %v69 = vld [vmem:[%s0] sm:$0x3]
  %v70 = vld [vmem:[%s0 + $0x2] sm:$0x3]
  %72 = vset.pattern.permute.xlu0 0
  %73 = vperm.xlu0 %72, %v28
  %v74 = vpop.permute.xlu0 %73
  %77 = vset.pattern.permute.xlu0 0
  %78 = vperm.xlu0 %77, %v29
  %v79 = vpop.permute.xlu0 %78
  %82 = vset.pattern.permute.xlu0 0
  %83 = vperm.xlu0 %82, %v30
  %v84 = vpop.permute.xlu0 %83
  %87 = vset.pattern.permute.xlu0 0
  %88 = vperm.xlu0 %87, %v31
  %v89 = vpop.permute.xlu0 %88
  %v91 = vperm.slane %v69, 0
  %v92 = vmul.f32 %v74, %v91
  %v93 = vmul.f32 %v79, %v91
  %v94 = vmul.f32 %v84, %v91
  %v95 = vmul.f32 %v89, %v91
  %96 = vset.pattern.permute.xlu0 1
  %97 = vperm.xlu0 %96, %v28
  %v98 = vpop.permute.xlu0 %97
  %100 = vset.pattern.permute.xlu0 1
  %101 = vperm.xlu0 %100, %v29
  %v102 = vpop.permute.xlu0 %101
  %104 = vset.pattern.permute.xlu0 1
  %105 = vperm.xlu0 %104, %v30
  %v106 = vpop.permute.xlu0 %105
  %108 = vset.pattern.permute.xlu0 1
  %109 = vperm.xlu0 %108, %v31
  %v110 = vpop.permute.xlu0 %109
  %v112 = vperm.slane %v69, 1
  %v113 = vmul.f32 %v98, %v112
  %v114 = vmul.f32 %v102, %v112
  %v115 = vmul.f32 %v106, %v112
  %v116 = vmul.f32 %v110, %v112
  %v117 = vadd.f32 %v92, %v113
  %v118 = vadd.f32 %v93, %v114
  %v119 = vadd.f32 %v94, %v115
  %v120 = vadd.f32 %v95, %v116
  %122 = vset.pattern.permute.xlu0 0
  %123 = vperm.xlu0 %122, %v32
  %v124 = vpop.permute.xlu0 %123
  %127 = vset.pattern.permute.xlu0 0
  %128 = vperm.xlu0 %127, %v33
  %v129 = vpop.permute.xlu0 %128
  %132 = vset.pattern.permute.xlu0 0
  %133 = vperm.xlu0 %132, %v34
  %v134 = vpop.permute.xlu0 %133
  %137 = vset.pattern.permute.xlu0 0
  %138 = vperm.xlu0 %137, %v35
  %v139 = vpop.permute.xlu0 %138
  %v141 = vadd.f32 %v117, %v124
  %v142 = vadd.f32 %v118, %v129
  %v143 = vadd.f32 %v119, %v134
  %v144 = vadd.f32 %v120, %v139
  %v145 = vperm.slane %v70, 0
  %v146 = vmul.f32 %v74, %v145
  %v147 = vmul.f32 %v79, %v145
  %v148 = vmul.f32 %v84, %v145
  %v149 = vmul.f32 %v89, %v145
  %v150 = vperm.slane %v70, 1
  %v151 = vmul.f32 %v98, %v150
  %v152 = vmul.f32 %v102, %v150
  %v153 = vmul.f32 %v106, %v150
  %v154 = vmul.f32 %v110, %v150
  %v155 = vadd.f32 %v146, %v151
  %v156 = vadd.f32 %v147, %v152
  %v157 = vadd.f32 %v148, %v153
  %v158 = vadd.f32 %v149, %v154
  %v159 = vadd.f32 %v155, %v124
  %v160 = vadd.f32 %v156, %v129
  %v161 = vadd.f32 %v157, %v134
  %v162 = vadd.f32 %v158, %v139
  %v163 = vtanh.pop %v141
  %v164 = vtanh.pop %v142
  %v165 = vtanh.pop %v143
  %v166 = vtanh.pop %v144
  %vm167 = vcmask 244736
  %v169 = vsel %vm167, %v36, 0
  %v172 = vsel %vm167, %v37, 0
  %v175 = vsel %vm167, %v38, 0
  %v178 = vsel %vm167, %v39, 0
  %vm180 = vcmask 1045504
  %v182 = vsel %vm180, %v166, 0
  %184 = vmatpush.msra.mxu0 0.0
  %185 = vmatpush.msra.mxu0 0.0
  %186 = vmatpush.msra.mxu0 0.0
  %187 = vmatpush.msra.mxu0 0.0
  %188 = vmatpush.msra.mxu0 0.0
  %189 = vmatpush.msra.mxu0 0.0
  %190 = vmatpush.msra.mxu0 0.0
  %191 = vmatpush.msra.mxu0 0.0
  %192 = vmatpush.msra.mxu0 0.0
  %193 = vmatpush.msra.mxu0 0.0
  %194 = vmatpush.msra.mxu0 0.0
  %195 = vmatpush.msra.mxu0 0.0
  %196 = vmatpush.msra.mxu0 %v182
  %197 = vmatpush.msra.mxu0 %v165
  %198 = vmatpush.msra.mxu0 %v164
  %199 = vmatpush.msra.mxu0 %v163
  %200 = vmatmul.f32.gmra.mxu0 %v169
  %v201 = vpop.f32.mrf.mxu0
  %v202 = vadd.f32 %v52, %v201
  %203 = vmatmul.f32.gmra.mxu0 %v172
  %v204 = vpop.f32.mrf.mxu0
  %v205 = vadd.f32 %v57, %v204
  %206 = vmatmul.f32.gmra.mxu0 %v175
  %v207 = vpop.f32.mrf.mxu0
  %v208 = vadd.f32 %v62, %v207
  %209 = vmatmul.f32.gmra.mxu0 %v178
  %v210 = vpop.f32.mrf.mxu0
  %v211 = vadd.f32 %v67, %v210
  %212 = vdwg.mxu0
  %v213 = vtanh.pop %v159
  %v214 = vtanh.pop %v160
  %v215 = vtanh.pop %v161
  %v216 = vtanh.pop %v162
  %v218 = vsel %vm180, %v216, 0
  %220 = vmatpush.msra.mxu0 0.0
  %221 = vmatpush.msra.mxu0 0.0
  %222 = vmatpush.msra.mxu0 0.0
  %223 = vmatpush.msra.mxu0 0.0
  %224 = vmatpush.msra.mxu0 0.0
  %225 = vmatpush.msra.mxu0 0.0
  %226 = vmatpush.msra.mxu0 0.0
  %227 = vmatpush.msra.mxu0 0.0
  %228 = vmatpush.msra.mxu0 0.0
  %229 = vmatpush.msra.mxu0 0.0
  %230 = vmatpush.msra.mxu0 0.0
  %231 = vmatpush.msra.mxu0 0.0
  %232 = vmatpush.msra.mxu0 %v218
  %233 = vmatpush.msra.mxu0 %v215
  %234 = vmatpush.msra.mxu0 %v214
  %235 = vmatpush.msra.mxu0 %v213
  %236 = vmatmul.f32.gmra.mxu0 %v169
  %v237 = vpop.f32.mrf.mxu0
  %v238 = vadd.f32 %v52, %v237
  %239 = vmatmul.f32.gmra.mxu0 %v172
  %v240 = vpop.f32.mrf.mxu0
  %v241 = vadd.f32 %v57, %v240
  %242 = vmatmul.f32.gmra.mxu0 %v175
  %v243 = vpop.f32.mrf.mxu0
  %v244 = vadd.f32 %v62, %v243
  %245 = vmatmul.f32.gmra.mxu0 %v178
  %v246 = vpop.f32.mrf.mxu0
  %v247 = vadd.f32 %v67, %v246
  %248 = vdwg.mxu0
  %v249 = vtanh.pop %v202
  %v250 = vtanh.pop %v205
  %v251 = vtanh.pop %v208
  %v252 = vtanh.pop %v211
  %v254 = vsel %vm180, %v252, 0
  %256 = vmatpush.msra.mxu0 0.0
  %257 = vmatpush.msra.mxu0 0.0
  %258 = vmatpush.msra.mxu0 0.0
  %259 = vmatpush.msra.mxu0 0.0
  %260 = vmatpush.msra.mxu0 0.0
  %261 = vmatpush.msra.mxu0 0.0
  %262 = vmatpush.msra.mxu0 0.0
  %263 = vmatpush.msra.mxu0 0.0
  %264 = vmatpush.msra.mxu0 0.0
  %265 = vmatpush.msra.mxu0 0.0
  %266 = vmatpush.msra.mxu0 0.0
  %267 = vmatpush.msra.mxu0 0.0
  %268 = vmatpush.msra.mxu0 %v254
  %269 = vmatpush.msra.mxu0 %v251
  %270 = vmatpush.msra.mxu0 %v250
  %271 = vmatpush.msra.mxu0 %v249
  %272 = vmatmul.f32.gmra.mxu0 %v169
  %v273 = vpop.f32.mrf.mxu0
  %v274 = vadd.f32 %v52, %v273
  %275 = vmatmul.f32.gmra.mxu0 %v172
  %v276 = vpop.f32.mrf.mxu0
  %v277 = vadd.f32 %v57, %v276
  %278 = vmatmul.f32.gmra.mxu0 %v175
  %v279 = vpop.f32.mrf.mxu0
  %v280 = vadd.f32 %v62, %v279
  %281 = vmatmul.f32.gmra.mxu0 %v178
  %v282 = vpop.f32.mrf.mxu0
  %v283 = vadd.f32 %v67, %v282
  %284 = vdwg.mxu0
  %v285 = vtanh.pop %v238
  %v286 = vtanh.pop %v241
  %v287 = vtanh.pop %v244
  %v288 = vtanh.pop %v247
  %v290 = vsel %vm180, %v288, 0
  %292 = vmatpush.msra.mxu0 0.0
  %293 = vmatpush.msra.mxu0 0.0
  %294 = vmatpush.msra.mxu0 0.0
  %295 = vmatpush.msra.mxu0 0.0
  %296 = vmatpush.msra.mxu0 0.0
  %297 = vmatpush.msra.mxu0 0.0
  %298 = vmatpush.msra.mxu0 0.0
  %299 = vmatpush.msra.mxu0 0.0
  %300 = vmatpush.msra.mxu0 0.0
  %301 = vmatpush.msra.mxu0 0.0
  %302 = vmatpush.msra.mxu0 0.0
  %303 = vmatpush.msra.mxu0 0.0
  %304 = vmatpush.msra.mxu0 %v290
  %305 = vmatpush.msra.mxu0 %v287
  %306 = vmatpush.msra.mxu0 %v286
  %307 = vmatpush.msra.mxu0 %v285
  %308 = vmatmul.f32.gmra.mxu0 %v169
  %v309 = vpop.f32.mrf.mxu0
  %v310 = vadd.f32 %v52, %v309
  %311 = vmatmul.f32.gmra.mxu0 %v172
  %v312 = vpop.f32.mrf.mxu0
  %v313 = vadd.f32 %v57, %v312
  %314 = vmatmul.f32.gmra.mxu0 %v175
  %v315 = vpop.f32.mrf.mxu0
  %v316 = vadd.f32 %v62, %v315
  %317 = vmatmul.f32.gmra.mxu0 %v178
  %v318 = vpop.f32.mrf.mxu0
  %v319 = vadd.f32 %v67, %v318
  %320 = vdwg.mxu0
  %v321 = vtanh.pop %v274
  %v322 = vtanh.pop %v277
  %v323 = vtanh.pop %v280
  %v324 = vtanh.pop %v283
  %v326 = vsel %vm180, %v324, 0
  %328 = vmatpush.msra.mxu0 0.0
  %329 = vmatpush.msra.mxu0 0.0
  %330 = vmatpush.msra.mxu0 0.0
  %331 = vmatpush.msra.mxu0 0.0
  %332 = vmatpush.msra.mxu0 0.0
  %333 = vmatpush.msra.mxu0 0.0
  %334 = vmatpush.msra.mxu0 0.0
  %335 = vmatpush.msra.mxu0 0.0
  %336 = vmatpush.msra.mxu0 0.0
  %337 = vmatpush.msra.mxu0 0.0
  %338 = vmatpush.msra.mxu0 0.0
  %339 = vmatpush.msra.mxu0 0.0
  %340 = vmatpush.msra.mxu0 %v326
  %341 = vmatpush.msra.mxu0 %v323
  %342 = vmatpush.msra.mxu0 %v322
  %343 = vmatpush.msra.mxu0 %v321
  %344 = vmatmul.f32.gmra.mxu0 %v169
  %v345 = vpop.f32.mrf.mxu0
  %v346 = vadd.f32 %v52, %v345
  %347 = vmatmul.f32.gmra.mxu0 %v172
  %v348 = vpop.f32.mrf.mxu0
  %v349 = vadd.f32 %v57, %v348
  %350 = vmatmul.f32.gmra.mxu0 %v175
  %v351 = vpop.f32.mrf.mxu0
  %v352 = vadd.f32 %v62, %v351
  %353 = vmatmul.f32.gmra.mxu0 %v178
  %v354 = vpop.f32.mrf.mxu0
  %v355 = vadd.f32 %v67, %v354
  %356 = vdwg.mxu0
  %v357 = vtanh.pop %v310
  %v358 = vtanh.pop %v313
  %v359 = vtanh.pop %v316
  %v360 = vtanh.pop %v319
  %v362 = vsel %vm180, %v360, 0
  %364 = vmatpush.msra.mxu0 0.0
  %365 = vmatpush.msra.mxu0 0.0
  %366 = vmatpush.msra.mxu0 0.0
  %367 = vmatpush.msra.mxu0 0.0
  %368 = vmatpush.msra.mxu0 0.0
  %369 = vmatpush.msra.mxu0 0.0
  %370 = vmatpush.msra.mxu0 0.0
  %371 = vmatpush.msra.mxu0 0.0
  %372 = vmatpush.msra.mxu0 0.0
  %373 = vmatpush.msra.mxu0 0.0
  %374 = vmatpush.msra.mxu0 0.0
  %375 = vmatpush.msra.mxu0 0.0
  %376 = vmatpush.msra.mxu0 %v362
  %377 = vmatpush.msra.mxu0 %v359
  %378 = vmatpush.msra.mxu0 %v358
  %379 = vmatpush.msra.mxu0 %v357
  %380 = vmatmul.f32.gmra.mxu0 %v169
  %v381 = vpop.f32.mrf.mxu0
  %v382 = vadd.f32 %v52, %v381
  %383 = vmatmul.f32.gmra.mxu0 %v172
  %v384 = vpop.f32.mrf.mxu0
  %v385 = vadd.f32 %v57, %v384
  %386 = vmatmul.f32.gmra.mxu0 %v175
  %v387 = vpop.f32.mrf.mxu0
  %v388 = vadd.f32 %v62, %v387
  %389 = vmatmul.f32.gmra.mxu0 %v178
  %v390 = vpop.f32.mrf.mxu0
  %v391 = vadd.f32 %v67, %v390
  %392 = vdwg.mxu0
  %v393 = vtanh.pop %v346
  %v394 = vtanh.pop %v349
  %v395 = vtanh.pop %v352
  %v396 = vtanh.pop %v355
  %v398 = vsel %vm180, %v396, 0
  %400 = vmatpush.msra.mxu0 0.0
  %401 = vmatpush.msra.mxu0 0.0
  %402 = vmatpush.msra.mxu0 0.0
  %403 = vmatpush.msra.mxu0 0.0
  %404 = vmatpush.msra.mxu0 0.0
  %405 = vmatpush.msra.mxu0 0.0
  %406 = vmatpush.msra.mxu0 0.0
  %407 = vmatpush.msra.mxu0 0.0
  %408 = vmatpush.msra.mxu0 0.0
  %409 = vmatpush.msra.mxu0 0.0
  %410 = vmatpush.msra.mxu0 0.0
  %411 = vmatpush.msra.mxu0 0.0
  %412 = vmatpush.msra.mxu0 %v398
  %413 = vmatpush.msra.mxu0 %v395
  %414 = vmatpush.msra.mxu0 %v394
  %415 = vmatpush.msra.mxu0 %v393
  %416 = vmatmul.f32.gmra.mxu0 %v169
  %v417 = vpop.f32.mrf.mxu0
  %v418 = vadd.f32 %v52, %v417
  %419 = vmatmul.f32.gmra.mxu0 %v172
  %v420 = vpop.f32.mrf.mxu0
  %v421 = vadd.f32 %v57, %v420
  %422 = vmatmul.f32.gmra.mxu0 %v175
  %v423 = vpop.f32.mrf.mxu0
  %v424 = vadd.f32 %v62, %v423
  %425 = vmatmul.f32.gmra.mxu0 %v178
  %v426 = vpop.f32.mrf.mxu0
  %v427 = vadd.f32 %v67, %v426
  %428 = vdwg.mxu0
  %v429 = vtanh.pop %v382
  %v430 = vtanh.pop %v385
  %v431 = vtanh.pop %v388
  %v432 = vtanh.pop %v391
  %v434 = vsel %vm180, %v432, 0
  %436 = vmatpush.msra.mxu0 0.0
  %437 = vmatpush.msra.mxu0 0.0
  %438 = vmatpush.msra.mxu0 0.0
  %439 = vmatpush.msra.mxu0 0.0
  %440 = vmatpush.msra.mxu0 0.0
  %441 = vmatpush.msra.mxu0 0.0
  %442 = vmatpush.msra.mxu0 0.0
  %443 = vmatpush.msra.mxu0 0.0
  %444 = vmatpush.msra.mxu0 0.0
  %445 = vmatpush.msra.mxu0 0.0
  %446 = vmatpush.msra.mxu0 0.0
  %447 = vmatpush.msra.mxu0 0.0
  %448 = vmatpush.msra.mxu0 %v434
  %449 = vmatpush.msra.mxu0 %v431
  %450 = vmatpush.msra.mxu0 %v430
  %451 = vmatpush.msra.mxu0 %v429
  %452 = vmatmul.f32.gmra.mxu0 %v169
  %v453 = vpop.f32.mrf.mxu0
  %v454 = vadd.f32 %v52, %v453
  %455 = vmatmul.f32.gmra.mxu0 %v172
  %v456 = vpop.f32.mrf.mxu0
  %v457 = vadd.f32 %v57, %v456
  %458 = vmatmul.f32.gmra.mxu0 %v175
  %v459 = vpop.f32.mrf.mxu0
  %v460 = vadd.f32 %v62, %v459
  %461 = vmatmul.f32.gmra.mxu0 %v178
  %v462 = vpop.f32.mrf.mxu0
  %v463 = vadd.f32 %v67, %v462
  %464 = vdwg.mxu0
  %v465 = vtanh.pop %v418
  %v466 = vtanh.pop %v421
  %v467 = vtanh.pop %v424
  %v468 = vtanh.pop %v427
  %v470 = vsel %vm180, %v468, 0
  %472 = vmatpush.msra.mxu0 0.0
  %473 = vmatpush.msra.mxu0 0.0
  %474 = vmatpush.msra.mxu0 0.0
  %475 = vmatpush.msra.mxu0 0.0
  %476 = vmatpush.msra.mxu0 0.0
  %477 = vmatpush.msra.mxu0 0.0
  %478 = vmatpush.msra.mxu0 0.0
  %479 = vmatpush.msra.mxu0 0.0
  %480 = vmatpush.msra.mxu0 0.0
  %481 = vmatpush.msra.mxu0 0.0
  %482 = vmatpush.msra.mxu0 0.0
  %483 = vmatpush.msra.mxu0 0.0
  %484 = vmatpush.msra.mxu0 %v470
  %485 = vmatpush.msra.mxu0 %v467
  %486 = vmatpush.msra.mxu0 %v466
  %487 = vmatpush.msra.mxu0 %v465
  %488 = vmatmul.f32.gmra.mxu0 %v169
  %v489 = vpop.f32.mrf.mxu0
  %v490 = vadd.f32 %v52, %v489
  %491 = vmatmul.f32.gmra.mxu0 %v172
  %v492 = vpop.f32.mrf.mxu0
  %v493 = vadd.f32 %v57, %v492
  %494 = vmatmul.f32.gmra.mxu0 %v175
  %v495 = vpop.f32.mrf.mxu0
  %v496 = vadd.f32 %v62, %v495
  %497 = vmatmul.f32.gmra.mxu0 %v178
  %v498 = vpop.f32.mrf.mxu0
  %v499 = vadd.f32 %v67, %v498
  %500 = vdwg.mxu0
  %v501 = vtanh.pop %v454
  %v502 = vtanh.pop %v457
  %v503 = vtanh.pop %v460
  %v504 = vtanh.pop %v463
  %v506 = vsel %vm180, %v504, 0
  %508 = vmatpush.msra.mxu0 0.0
  %509 = vmatpush.msra.mxu0 0.0
  %510 = vmatpush.msra.mxu0 0.0
  %511 = vmatpush.msra.mxu0 0.0
  %512 = vmatpush.msra.mxu0 0.0
  %513 = vmatpush.msra.mxu0 0.0
  %514 = vmatpush.msra.mxu0 0.0
  %515 = vmatpush.msra.mxu0 0.0
  %516 = vmatpush.msra.mxu0 0.0
  %517 = vmatpush.msra.mxu0 0.0
  %518 = vmatpush.msra.mxu0 0.0
  %519 = vmatpush.msra.mxu0 0.0
  %520 = vmatpush.msra.mxu0 %v506
  %521 = vmatpush.msra.mxu0 %v503
  %522 = vmatpush.msra.mxu0 %v502
  %523 = vmatpush.msra.mxu0 %v501
  %524 = vmatmul.f32.gmra.mxu0 %v169
  %v525 = vpop.f32.mrf.mxu0
  %v526 = vadd.f32 %v52, %v525
  %527 = vmatmul.f32.gmra.mxu0 %v172
  %v528 = vpop.f32.mrf.mxu0
  %v529 = vadd.f32 %v57, %v528
  %530 = vmatmul.f32.gmra.mxu0 %v175
  %v531 = vpop.f32.mrf.mxu0
  %v532 = vadd.f32 %v62, %v531
  %533 = vmatmul.f32.gmra.mxu0 %v178
  %v534 = vpop.f32.mrf.mxu0
  %v535 = vadd.f32 %v67, %v534
  %536 = vdwg.mxu0
  %v537 = vtanh.pop %v490
  %v538 = vtanh.pop %v493
  %v539 = vtanh.pop %v496
  %v540 = vtanh.pop %v499
  %v542 = vsel %vm180, %v540, 0
  %544 = vmatpush.msra.mxu0 0.0
  %545 = vmatpush.msra.mxu0 0.0
  %546 = vmatpush.msra.mxu0 0.0
  %547 = vmatpush.msra.mxu0 0.0
  %548 = vmatpush.msra.mxu0 0.0
  %549 = vmatpush.msra.mxu0 0.0
  %550 = vmatpush.msra.mxu0 0.0
  %551 = vmatpush.msra.mxu0 0.0
  %552 = vmatpush.msra.mxu0 0.0
  %553 = vmatpush.msra.mxu0 0.0
  %554 = vmatpush.msra.mxu0 0.0
  %555 = vmatpush.msra.mxu0 0.0
  %556 = vmatpush.msra.mxu0 %v542
  %557 = vmatpush.msra.mxu0 %v539
  %558 = vmatpush.msra.mxu0 %v538
  %559 = vmatpush.msra.mxu0 %v537
  %560 = vmatmul.f32.gmra.mxu0 %v169
  %v561 = vpop.f32.mrf.mxu0
  %v562 = vadd.f32 %v52, %v561
  %563 = vmatmul.f32.gmra.mxu0 %v172
  %v564 = vpop.f32.mrf.mxu0
  %v565 = vadd.f32 %v57, %v564
  %566 = vmatmul.f32.gmra.mxu0 %v175
  %v567 = vpop.f32.mrf.mxu0
  %v568 = vadd.f32 %v62, %v567
  %569 = vmatmul.f32.gmra.mxu0 %v178
  %v570 = vpop.f32.mrf.mxu0
  %v571 = vadd.f32 %v67, %v570
  %572 = vdwg.mxu0
  %v573 = vtanh.pop %v526
  %v574 = vtanh.pop %v529
  %v575 = vtanh.pop %v532
  %v576 = vtanh.pop %v535
  %v578 = vsel %vm180, %v576, 0
  %580 = vmatpush.msra.mxu0 0.0
  %581 = vmatpush.msra.mxu0 0.0
  %582 = vmatpush.msra.mxu0 0.0
  %583 = vmatpush.msra.mxu0 0.0
  %584 = vmatpush.msra.mxu0 0.0
  %585 = vmatpush.msra.mxu0 0.0
  %586 = vmatpush.msra.mxu0 0.0
  %587 = vmatpush.msra.mxu0 0.0
  %588 = vmatpush.msra.mxu0 0.0
  %589 = vmatpush.msra.mxu0 0.0
  %590 = vmatpush.msra.mxu0 0.0
  %591 = vmatpush.msra.mxu0 0.0
  %592 = vmatpush.msra.mxu0 %v578
  %593 = vmatpush.msra.mxu0 %v575
  %594 = vmatpush.msra.mxu0 %v574
  %595 = vmatpush.msra.mxu0 %v573
  %596 = vmatmul.f32.gmra.mxu0 %v169
  %v597 = vpop.f32.mrf.mxu0
  %v598 = vadd.f32 %v52, %v597
  %599 = vmatmul.f32.gmra.mxu0 %v172
  %v600 = vpop.f32.mrf.mxu0
  %v601 = vadd.f32 %v57, %v600
  %602 = vmatmul.f32.gmra.mxu0 %v175
  %v603 = vpop.f32.mrf.mxu0
  %v604 = vadd.f32 %v62, %v603
  %605 = vmatmul.f32.gmra.mxu0 %v178
  %v606 = vpop.f32.mrf.mxu0
  %v607 = vadd.f32 %v67, %v606
  %608 = vdwg.mxu0
  %v609 = vtanh.pop %v562
  %v610 = vtanh.pop %v565
  %v611 = vtanh.pop %v568
  %v612 = vtanh.pop %v571
  %v613 = vtanh.pop %v598
  %v614 = vtanh.pop %v601
  %v615 = vtanh.pop %v604
  %v616 = vtanh.pop %v607
  %618 = vset.pattern.permute.xlu0 0
  %619 = vperm.xlu0 %618, %v40
  %v620 = vpop.permute.xlu0 %619
  %623 = vset.pattern.permute.xlu0 0
  %624 = vperm.xlu0 %623, %v41
  %v625 = vpop.permute.xlu0 %624
  %628 = vset.pattern.permute.xlu0 0
  %629 = vperm.xlu0 %628, %v42
  %v630 = vpop.permute.xlu0 %629
  %633 = vset.pattern.permute.xlu0 0
  %634 = vperm.xlu0 %633, %v43
  %v635 = vpop.permute.xlu0 %634
  %v637 = vmul.f32 %v620, %v609
  %v638 = vmul.f32 %v625, %v610
  %v639 = vmul.f32 %v630, %v611
  %v640 = vmul.f32 %v635, %v612
  %v641 = vadd.f32 %v637, %v638
  %v642 = vadd.f32 %v641, %v639
  %v643 = vsel %vm180, %v640, 0.0
  %v644 = vadd.f32 %v642, %v643
  %v645 = vrot.slane %v644, 4
  %v646 = vadd.f32 %v644, %v645
  %v647 = vrot.slane %v646, 2
  %v648 = vadd.f32 %v646, %v647
  %v649 = vrot.slane %v648, 1
  %v650 = vadd.f32 %v648, %v649
  %652 = vset.pattern.permute.xlu0 0
  %653 = vperm.xlu0 %652, %v44
  %v654 = vpop.permute.xlu0 %653
  %v656 = vperm.slane %v654, 0
  %v657 = vadd.f32 %v650, %v656
  %v658 = vlaneseq
  %vm659 = vcmp.ge.s32.totalorder %v658, 0
  %vm660 = vcmp.lt.s32.totalorder %v658, 128
  %vm661 = vmand %vm659, %vm660
  %662 = vst.msk [vmem:[%s7] sm:$0x1] %vm661, %v657
  %v663 = vmul.f32 %v620, %v613
  %v664 = vmul.f32 %v625, %v614
  %v665 = vmul.f32 %v630, %v615
  %v666 = vmul.f32 %v635, %v616
  %v667 = vadd.f32 %v663, %v664
  %v668 = vadd.f32 %v667, %v665
  %v669 = vsel %vm180, %v666, 0.0
  %v670 = vadd.f32 %v668, %v669
  %v671 = vrot.slane %v670, 4
  %v672 = vadd.f32 %v670, %v671
  %v673 = vrot.slane %v672, 2
  %v674 = vadd.f32 %v672, %v673
  %v675 = vrot.slane %v674, 1
  %v676 = vadd.f32 %v674, %v675
  %v677 = vadd.f32 %v676, %v656
  %678 = vst.msk [vmem:[%s7 + $0x1] sm:$0x1] %vm661, %v677
  // Predicated region
  $region30: #{nn_v_forward.1} parent=0 // pred_check
    _
  $region31: #{nn_v_forward.1} parent=0 // pred_check_branch
    %680 = sbr.rel (0) target = $region33
  $region32: #{nn_v_forward.1} parent=0 // pred_region
    _
  $region33: #{nn_v_forward.1} parent=0 // pred_fallthru
    _
  // Predicated region
  $region34: #{nn_v_forward.1} parent=0 // pred_check
    _
  $region35: #{nn_v_forward.1} parent=0 // pred_check_branch
    %682 = sbr.rel (0) target = $region37
  $region36: #{nn_v_forward.1} parent=0 // pred_region
    _
  $region37: #{nn_v_forward.1} parent=0 // pred_fallthru
    _

</llo_original>
